<compile_context>
chip_gen: v7x
topology: tpu7x:2x2x1
jax: 0.10.0
libtpu: 0.0.40
codegen_flags: <defaults>
</compile_context>

<pallas_src>
import functools

import jax
import jax.numpy as jnp
from jax.experimental import pallas as pl
from jax.experimental.pallas import tpu as pltpu


def _kd_kernel(logits_ref, teacher_ref, labels_ref, out_ref, kl_acc, ce_acc, *,
               soft_weight: float, temperature: float,
               batch_size: int, tile_rows: int, tiles_per_core: int):
    c = pl.program_id(0)   # core (parallel) axis
    i = pl.program_id(1)   # batch-tile (arbitrary) axis within this core

    @pl.when(i == 0)
    def _init():
        kl_acc[...] = jnp.zeros_like(kl_acc)
        ce_acc[...] = jnp.zeros_like(ce_acc)

    x = logits_ref[...].astype(jnp.float32)    # (TB, C) student logits
    t = teacher_ref[...].astype(jnp.float32)   # (TB, C) teacher logits
    lab = labels_ref[...]                      # (TB, 1) int32 class ids

    TB, C = x.shape
    inv_T = jnp.float32(1.0 / temperature)

    # Shared student row max: max(x/T) == max(x)/T for T > 0.
    m_x = jnp.max(x, axis=1, keepdims=True)    # (TB, 1)
    m_t = jnp.max(t, axis=1, keepdims=True)

    xs = (x - m_x) * inv_T                     # stabilized student logits / T
    ts = (t - m_t) * inv_T                     # stabilized teacher logits / T

    log_zs = jnp.log(jnp.sum(jnp.exp(xs), axis=1, keepdims=True))
    t_exp = jnp.exp(ts)
    t_sum = jnp.sum(t_exp, axis=1, keepdims=True)

    # KL per row, algebraically folded (log_p_s / log_p_t never materialized):
    #   sum_c p_t*(log_p_t - log_p_s)
    #     = sum_c t_exp*(ts - xs)/t_sum + (log_zs - log(t_sum))
    kl_num = jnp.sum(t_exp * (ts - xs), axis=1, keepdims=True)
    kl_row = kl_num / t_sum + (log_zs - jnp.log(t_sum))          # (TB, 1)

    # Cross-entropy (temperature 1) without materializing log-softmax:
    #   ce = (m_x + log(sum exp(x - m_x))) - x[label]
    log_z1 = jnp.log(jnp.sum(jnp.exp(x - m_x), axis=1, keepdims=True))
    class_ids = jax.lax.broadcasted_iota(jnp.int32, (TB, C), 1)
    x_at_label = jnp.sum(jnp.where(class_ids == lab, x, 0.0),
                         axis=1, keepdims=True)
    ce_row = (m_x + log_z1) - x_at_label                          # (TB, 1)

    # Row-validity mask: covers the partial final tile and the duplicated
    # (clamped) tile a core may see when tiles don't split evenly.
    tile = c * tiles_per_core + i
    row_ids = jax.lax.broadcasted_iota(jnp.int32, (TB, 1), 0) + tile * tile_rows
    valid = row_ids < batch_size
    kl_acc[...] += jnp.where(valid, kl_row, 0.0)
    ce_acc[...] += jnp.where(valid, ce_row, 0.0)

    @pl.when(i == pl.num_programs(1) - 1)
    def _finalize():
        T = jnp.float32(temperature)
        sw = jnp.float32(soft_weight)
        inv_B = jnp.float32(1.0 / batch_size)
        out_ref[0, 0] = jnp.sum(kl_acc[...]) * inv_B * (sw * T * T)
        out_ref[0, 1] = jnp.sum(ce_acc[...]) * inv_B * (jnp.float32(1.0) - sw)


def kdist_loss(logits, teacher_logits, labels, *, soft_weight, temperature,
               tile_rows=None):
    """Pallas implementation of KDistLoss.forward for the tensor-tensor path.

    Accepts f32 or bf16 logits / teacher_logits (upcast to f32 per tile inside
    the kernel); labels are int class ids of shape (B,).
    """
    B, C = logits.shape
    itm = jnp.dtype(logits.dtype).itemsize
    Cp = ((C + 127) // 128) * 128   # lane-padded physical width (budget only)

    # VMEM budget: 2 inputs x 2 pipeline buffers at input dtype plus ~8 live
    # (TB, Cp) f32 intermediates inside the kernel.  Target ~30 MiB so it fits
    # comfortably under v7x's 64 MiB physical VMEM (and trivially on v5e/v6e).
    per_row_bytes = 2 * 2 * Cp * itm + 8 * Cp * 4
    budget_bytes = 30 * 1024 * 1024
    if tile_rows is None:
        TB = max(8, min(1024, (budget_bytes // per_row_bytes) // 8 * 8))
    else:
        TB = max(8, ((int(tile_rows) + 7) // 8) * 8)
    TB = min(TB, ((B + 7) // 8) * 8)          # never larger than the batch

    num_tiles = pl.cdiv(B, TB)
    NC = min(2, num_tiles)                    # leading parallel axis (v7x 2 TCs)
    tiles_per_core = pl.cdiv(num_tiles, NC)
    last_tile = num_tiles - 1

    labels2d = labels.astype(jnp.int32).reshape(B, 1)

    vmem_need = TB * per_row_bytes + (2 << 20)
    vmem_limit = int(min(40 << 20, max(vmem_need + (vmem_need >> 2), 16 << 20)))

    def data_map(c, i):
        # Clamp so the DMA never indexes past the last batch tile; the kernel
        # masks the duplicated rows via the *unclamped* tile index.
        return (jnp.minimum(c * tiles_per_core + i, last_tile), 0)

    kernel = functools.partial(
        _kd_kernel,
        soft_weight=float(soft_weight),
        temperature=float(temperature),
        batch_size=int(B),
        tile_rows=int(TB),
        tiles_per_core=int(tiles_per_core),
    )

    out = pl.pallas_call(
        kernel,
        out_shape=jax.ShapeDtypeStruct((NC, 2), jnp.float32),
        grid=(NC, tiles_per_core),
        in_specs=[
            pl.BlockSpec((TB, C), data_map),   # student logits (full class dim)
            pl.BlockSpec((TB, C), data_map),   # teacher logits
            pl.BlockSpec((TB, 1), data_map),   # labels
        ],
        out_specs=pl.BlockSpec((1, 2), lambda c, i: (c, 0),
                               memory_space=pltpu.MemorySpace.SMEM),
        scratch_shapes=[pltpu.VMEM((TB, 1), jnp.float32),   # KL row accumulator
                        pltpu.VMEM((TB, 1), jnp.float32)],  # CE row accumulator
        compiler_params=pltpu.CompilerParams(
            dimension_semantics=("parallel", "arbitrary"),
            vmem_limit_bytes=vmem_limit,
        ),
    )(logits, teacher_logits, labels2d)

    total = jnp.sum(out, axis=0)    # combine per-core partials (scaling is linear)
    return total[0], total[1]


def _kdist_loss_ref(logits, teacher_logits, labels, *, soft_weight, temperature):
    """Pure-JAX reference mirroring the PyTorch kd_loss tensor-tensor branch."""
    T = temperature
    B = logits.shape[0]
    log_p_s = jax.nn.log_softmax(logits.astype(jnp.float32) / T, axis=1)
    p_t = jax.nn.softmax(teacher_logits.astype(jnp.float32) / T, axis=1)
    kl = jnp.sum(p_t * (jnp.log(p_t) - log_p_s))
    soft_loss = kl / B
    log_p1 = jax.nn.log_softmax(logits.astype(jnp.float32), axis=1)
    hard_loss = -jnp.mean(jnp.take_along_axis(log_p1, labels[:, None], axis=1))
    return soft_loss * (soft_weight * T * T), hard_loss * (1.0 - soft_weight)


def _check(B, C, *, soft_weight, temperature, seed, tile_rows=None):
    key = jax.random.PRNGKey(seed)
    k1, k2, k3 = jax.random.split(key, 3)
    logits = jax.random.normal(k1, (B, C), dtype=jnp.float32)
    teacher_logits = jax.random.normal(k2, (B, C), dtype=jnp.float32)
    labels = jax.random.randint(k3, (B,), 0, C, dtype=jnp.int32)

    soft, hard = kdist_loss(logits, teacher_logits, labels,
                            soft_weight=soft_weight, temperature=temperature,
                            tile_rows=tile_rows)
    jax.block_until_ready((soft, hard))

    soft_ref, hard_ref = _kdist_loss_ref(logits, teacher_logits, labels,
                                         soft_weight=soft_weight,
                                         temperature=temperature)
    assert jnp.allclose(soft, soft_ref, atol=1e-4, rtol=1e-4), (B, C, soft, soft_ref)
    assert jnp.allclose(hard, hard_ref, atol=1e-4, rtol=1e-4), (B, C, hard, hard_ref)


if __name__ == "__main__":
    soft_weight = 0.7
    temperature = 4.0

    # Main small case: batch=8, num_classes=32 (aligned).
    _check(8, 32, soft_weight=soft_weight, temperature=temperature, seed=0)
    # Unaligned batch and class dims: exercises partial-row masking and the
    # full-C (non-128-multiple) block path with no wrapper padding.
    _check(10, 37, soft_weight=soft_weight, temperature=temperature, seed=1)
    # Multiple batch tiles + both rows of the per-core (NC=2) accumulator,
    # including the clamped/duplicated-tile mask path.
    _check(24, 32, soft_weight=soft_weight, temperature=temperature, seed=2,
           tile_rows=8)

    print("KERNEL_OK")
</pallas_src>

<mosaic_0001>
module attributes {stable_mosaic.version = 11 : i64} {
  func.func @_kd_kernel(%arg0: i32, %arg1: i32, %arg2: memref<8x32xf32, #tpu.memory_space<vmem>>, %arg3: memref<8x32xf32, #tpu.memory_space<vmem>>, %arg4: memref<8x1xi32, #tpu.memory_space<vmem>>, %arg5: memref<1x2xf32, #tpu.memory_space<smem>>, %arg6: memref<8x1xf32, #tpu.memory_space<vmem>>, %arg7: memref<8x1xf32, #tpu.memory_space<vmem>>) attributes {dimension_semantics = [#tpu.dimension_semantics<parallel>, #tpu.dimension_semantics<arbitrary>], iteration_bounds = array<i64: 1, 1>, scalar_prefetch = 0 : i64, scratch_operands = 2 : i64, tpu.core_type = #tpu.core_type<tc>, window_params = [{transform_indices = @transform_0, window_bounds = array<i64: 8, 32>}, {transform_indices = @transform_1, window_bounds = array<i64: 8, 32>}, {transform_indices = @transform_2, window_bounds = array<i64: 8, 1>}, {transform_indices = @transform_3, window_bounds = array<i64: 1, 2>}]} {
    %c0_i32 = arith.constant 0 : i32
    %0 = arith.cmpi eq, %arg1, %c0_i32 : i32
    %1 = arith.extui %0 : i1 to i32
    %c0_i32_0 = arith.constant 0 : i32
    %2 = arith.cmpi ne, %1, %c0_i32_0 : i32
    scf.if %2 {
      %cst_28 = arith.constant 0.000000e+00 : f32
      %69 = vector.broadcast %cst_28 : f32 to vector<8x1xf32>
      %c0_29 = arith.constant 0 : index
      %c0_30 = arith.constant 0 : index
      %70 = vector.load %arg6[%c0_29, %c0_30] : memref<8x1xf32, #tpu.memory_space<vmem>>, vector<8x1xf32>
      tpu.vector_store %arg6[%c0_29, %c0_30], %69 {strides = array<i32>} : memref<8x1xf32, #tpu.memory_space<vmem>>, vector<8x1xf32>,
      %cst_31 = arith.constant 0.000000e+00 : f32
      %71 = vector.broadcast %cst_31 : f32 to vector<8x1xf32>
      %c0_32 = arith.constant 0 : index
      %c0_33 = arith.constant 0 : index
      %72 = vector.load %arg7[%c0_32, %c0_33] : memref<8x1xf32, #tpu.memory_space<vmem>>, vector<8x1xf32>
      tpu.vector_store %arg7[%c0_32, %c0_33], %71 {strides = array<i32>} : memref<8x1xf32, #tpu.memory_space<vmem>>, vector<8x1xf32>,
    } else {
    }
    %c0 = arith.constant 0 : index
    %c0_1 = arith.constant 0 : index
    %3 = vector.load %arg2[%c0, %c0_1] : memref<8x32xf32, #tpu.memory_space<vmem>>, vector<8x32xf32>
    %c0_2 = arith.constant 0 : index
    %c0_3 = arith.constant 0 : index
    %4 = vector.load %arg3[%c0_2, %c0_3] : memref<8x32xf32, #tpu.memory_space<vmem>>, vector<8x32xf32>
    %c0_4 = arith.constant 0 : index
    %c0_5 = arith.constant 0 : index
    %5 = vector.load %arg4[%c0_4, %c0_5] : memref<8x1xi32, #tpu.memory_space<vmem>>, vector<8x1xi32>
    %cst = arith.constant dense<0xFF800000> : vector<8xf32>
    %6 = vector.multi_reduction <maximumf>, %3, %cst [1] : vector<8x32xf32> to vector<8xf32>
    %7 = vector.shape_cast %6 : vector<8xf32> to vector<8x1xf32>
    %cst_6 = arith.constant dense<0xFF800000> : vector<8xf32>
    %8 = vector.multi_reduction <maximumf>, %4, %cst_6 [1] : vector<8x32xf32> to vector<8xf32>
    %9 = vector.shape_cast %8 : vector<8xf32> to vector<8x1xf32>
    %10 = vector.broadcast %7 : vector<8x1xf32> to vector<8x32xf32>
    %11 = arith.subf %3, %10 : vector<8x32xf32>
    %cst_7 = arith.constant 2.500000e-01 : f32
    %12 = vector.broadcast %cst_7 : f32 to vector<8x32xf32>
    %13 = arith.mulf %11, %12 : vector<8x32xf32>
    %14 = vector.broadcast %9 : vector<8x1xf32> to vector<8x32xf32>
    %15 = arith.subf %4, %14 : vector<8x32xf32>
    %cst_8 = arith.constant 2.500000e-01 : f32
    %16 = vector.broadcast %cst_8 : f32 to vector<8x32xf32>
    %17 = arith.mulf %15, %16 : vector<8x32xf32>
    %18 = math.exp %13 : vector<8x32xf32>
    %cst_9 = arith.constant dense<0.000000e+00> : vector<8xf32>
    %19 = vector.multi_reduction <add>, %18, %cst_9 [1] : vector<8x32xf32> to vector<8xf32>
    %20 = vector.shape_cast %19 : vector<8xf32> to vector<8x1xf32>
    %21 = math.log %20 : vector<8x1xf32>
    %22 = math.exp %17 : vector<8x32xf32>
    %cst_10 = arith.constant dense<0.000000e+00> : vector<8xf32>
    %23 = vector.multi_reduction <add>, %22, %cst_10 [1] : vector<8x32xf32> to vector<8xf32>
    %24 = vector.shape_cast %23 : vector<8xf32> to vector<8x1xf32>
    %25 = arith.subf %17, %13 : vector<8x32xf32>
    %26 = arith.mulf %22, %25 : vector<8x32xf32>
    %cst_11 = arith.constant dense<0.000000e+00> : vector<8xf32>
    %27 = vector.multi_reduction <add>, %26, %cst_11 [1] : vector<8x32xf32> to vector<8xf32>
    %28 = vector.shape_cast %27 : vector<8xf32> to vector<8x1xf32>
    %29 = arith.divf %28, %24 : vector<8x1xf32>
    %30 = math.log %24 : vector<8x1xf32>
    %31 = arith.subf %21, %30 : vector<8x1xf32>
    %32 = arith.addf %29, %31 : vector<8x1xf32>
    %33 = vector.broadcast %7 : vector<8x1xf32> to vector<8x32xf32>
    %34 = arith.subf %3, %33 : vector<8x32xf32>
    %35 = math.exp %34 : vector<8x32xf32>
    %cst_12 = arith.constant dense<0.000000e+00> : vector<8xf32>
    %36 = vector.multi_reduction <add>, %35, %cst_12 [1] : vector<8x32xf32> to vector<8xf32>
    %37 = vector.shape_cast %36 : vector<8xf32> to vector<8x1xf32>
    %38 = math.log %37 : vector<8x1xf32>
    %39 = tpu.iota {dimensions = array<i32: 1>} : vector<8x32xi32>
    %40 = vector.broadcast %5 : vector<8x1xi32> to vector<8x32xi32>
    %41 = arith.cmpi eq, %39, %40 : vector<8x32xi32>
    %cst_13 = arith.constant 0.000000e+00 : f32
    %42 = vector.broadcast %cst_13 : f32 to vector<8x32xf32>
    %43 = arith.select %41, %3, %42 : vector<8x32xi1>, vector<8x32xf32>
    %cst_14 = arith.constant dense<0.000000e+00> : vector<8xf32>
    %44 = vector.multi_reduction <add>, %43, %cst_14 [1] : vector<8x32xf32> to vector<8xf32>
    %45 = vector.shape_cast %44 : vector<8xf32> to vector<8x1xf32>
    %46 = arith.addf %7, %38 : vector<8x1xf32>
    %47 = arith.subf %46, %45 : vector<8x1xf32>
    %c1_i32 = arith.constant 1 : i32
    %48 = arith.muli %arg0, %c1_i32 : i32
    %49 = arith.addi %48, %arg1 : i32
    %50 = tpu.iota {dimensions = array<i32: 0>} : vector<8x1xi32>
    %c8_i32 = arith.constant 8 : i32
    %51 = arith.muli %49, %c8_i32 : i32
    %52 = vector.broadcast %51 : i32 to vector<8x1xi32>
    %53 = arith.addi %50, %52 : vector<8x1xi32>
    %c8_i32_15 = arith.constant 8 : i32
    %54 = vector.broadcast %c8_i32_15 : i32 to vector<8x1xi32>
    %55 = arith.cmpi slt, %53, %54 : vector<8x1xi32>
    %c0_16 = arith.constant 0 : index
    %c0_17 = arith.constant 0 : index
    %56 = vector.load %arg6[%c0_16, %c0_17] : memref<8x1xf32, #tpu.memory_space<vmem>>, vector<8x1xf32>
    %cst_18 = arith.constant 0.000000e+00 : f32
    %57 = vector.broadcast %cst_18 : f32 to vector<8x1xf32>
    %58 = arith.select %55, %32, %57 : vector<8x1xi1>, vector<8x1xf32>
    %59 = arith.addf %56, %58 : vector<8x1xf32>
    %c0_19 = arith.constant 0 : index
    %c0_20 = arith.constant 0 : index
    %60 = vector.load %arg6[%c0_19, %c0_20] : memref<8x1xf32, #tpu.memory_space<vmem>>, vector<8x1xf32>
    tpu.vector_store %arg6[%c0_19, %c0_20], %59 {strides = array<i32>} : memref<8x1xf32, #tpu.memory_space<vmem>>, vector<8x1xf32>,
    %c0_21 = arith.constant 0 : index
    %c0_22 = arith.constant 0 : index
    %61 = vector.load %arg7[%c0_21, %c0_22] : memref<8x1xf32, #tpu.memory_space<vmem>>, vector<8x1xf32>
    %cst_23 = arith.constant 0.000000e+00 : f32
    %62 = vector.broadcast %cst_23 : f32 to vector<8x1xf32>
    %63 = arith.select %55, %47, %62 : vector<8x1xi1>, vector<8x1xf32>
    %64 = arith.addf %61, %63 : vector<8x1xf32>
    %c0_24 = arith.constant 0 : index
    %c0_25 = arith.constant 0 : index
    %65 = vector.load %arg7[%c0_24, %c0_25] : memref<8x1xf32, #tpu.memory_space<vmem>>, vector<8x1xf32>
    tpu.vector_store %arg7[%c0_24, %c0_25], %64 {strides = array<i32>} : memref<8x1xf32, #tpu.memory_space<vmem>>, vector<8x1xf32>,
    %c0_i32_26 = arith.constant 0 : i32
    %66 = arith.cmpi eq, %arg1, %c0_i32_26 : i32
    %67 = arith.extui %66 : i1 to i32
    %c0_i32_27 = arith.constant 0 : i32
    %68 = arith.cmpi ne, %67, %c0_i32_27 : i32
    scf.if %68 {
      %c0_28 = arith.constant 0 : index
      %c0_29 = arith.constant 0 : index
      %69 = vector.load %arg6[%c0_28, %c0_29] : memref<8x1xf32, #tpu.memory_space<vmem>>, vector<8x1xf32>
      %70 = vector.shape_cast %69 : vector<8x1xf32> to vector<1x8x1xf32>
      %cst_30 = arith.constant dense<0.000000e+00> : vector<1xf32>
      %71 = vector.multi_reduction <add>, %70, %cst_30 [1, 2] : vector<1x8x1xf32> to vector<1xf32>
      %72 = vector.shape_cast %71 : vector<1xf32> to vector<1x1x1xf32>
      %73 = vector.extract %72[0, 0, 0] : f32 from vector<1x1x1xf32>
      %cst_31 = arith.constant 1.250000e-01 : f32
      %74 = arith.mulf %73, %cst_31 : f32
      %cst_32 = arith.constant 0.699999988 : f32
      %cst_33 = arith.constant 4.000000e+00 : f32
      %75 = arith.mulf %cst_32, %cst_33 : f32
      %cst_34 = arith.constant 4.000000e+00 : f32
      %76 = arith.mulf %75, %cst_34 : f32
      %77 = arith.mulf %74, %76 : f32
      %c0_35 = arith.constant 0 : index
      %c0_36 = arith.constant 0 : index
      %78 = memref.load %arg5[%c0_35, %c0_36] : memref<1x2xf32, #tpu.memory_space<smem>>
      memref.store %77, %arg5[%c0_35, %c0_36] : memref<1x2xf32, #tpu.memory_space<smem>>
      %c0_37 = arith.constant 0 : index
      %c0_38 = arith.constant 0 : index
      %79 = vector.load %arg7[%c0_37, %c0_38] : memref<8x1xf32, #tpu.memory_space<vmem>>, vector<8x1xf32>
      %80 = vector.shape_cast %79 : vector<8x1xf32> to vector<1x8x1xf32>
      %cst_39 = arith.constant dense<0.000000e+00> : vector<1xf32>
      %81 = vector.multi_reduction <add>, %80, %cst_39 [1, 2] : vector<1x8x1xf32> to vector<1xf32>
      %82 = vector.shape_cast %81 : vector<1xf32> to vector<1x1x1xf32>
      %83 = vector.extract %82[0, 0, 0] : f32 from vector<1x1x1xf32>
      %cst_40 = arith.constant 1.250000e-01 : f32
      %84 = arith.mulf %83, %cst_40 : f32
      %cst_41 = arith.constant 1.000000e+00 : f32
      %cst_42 = arith.constant 0.699999988 : f32
      %85 = arith.subf %cst_41, %cst_42 : f32
      %86 = arith.mulf %84, %85 : f32
      %c0_43 = arith.constant 0 : index
      %c1 = arith.constant 1 : index
      %87 = memref.load %arg5[%c0_43, %c1] : memref<1x2xf32, #tpu.memory_space<smem>>
      memref.store %86, %arg5[%c0_43, %c1] : memref<1x2xf32, #tpu.memory_space<smem>>
    } else {
    }
    return
  }
  func.func @transform_0(%arg0: i32, %arg1: i32) -> (i32, i32) {
    %c1_i32 = arith.constant 1 : i32
    %0 = arith.muli %arg0, %c1_i32 : i32
    %1 = arith.addi %0, %arg1 : i32
    %c0_i32 = arith.constant 0 : i32
    %2 = arith.minsi %1, %c0_i32 : i32
    %c0_i32_0 = arith.constant 0 : i32
    %c0_i32_1 = arith.constant 0 : i32
    return %2, %c0_i32_0 : i32, i32
  }
  func.func @transform_1(%arg0: i32, %arg1: i32) -> (i32, i32) {
    %c1_i32 = arith.constant 1 : i32
    %0 = arith.muli %arg0, %c1_i32 : i32
    %1 = arith.addi %0, %arg1 : i32
    %c0_i32 = arith.constant 0 : i32
    %2 = arith.minsi %1, %c0_i32 : i32
    %c0_i32_0 = arith.constant 0 : i32
    %c0_i32_1 = arith.constant 0 : i32
    return %2, %c0_i32_0 : i32, i32
  }
  func.func @transform_2(%arg0: i32, %arg1: i32) -> (i32, i32) {
    %c1_i32 = arith.constant 1 : i32
    %0 = arith.muli %arg0, %c1_i32 : i32
    %1 = arith.addi %0, %arg1 : i32
    %c0_i32 = arith.constant 0 : i32
    %2 = arith.minsi %1, %c0_i32 : i32
    %c0_i32_0 = arith.constant 0 : i32
    %c0_i32_1 = arith.constant 0 : i32
    return %2, %c0_i32_0 : i32, i32
  }
  func.func @transform_3(%arg0: i32, %arg1: i32) -> (i32, i32) {
    %c0_i32 = arith.constant 0 : i32
    %c0_i32_0 = arith.constant 0 : i32
    return %arg0, %c0_i32 : i32, i32
  }
}

</mosaic_0001>

<llo_original>
// kernel: tpu_custom_call.1
$region0: #{tpu_custom_call.1}
  #allocation0 [shape = 'u32[]', space=smem, size = 0x4, offset = 0x4, fixed_abs, tag = 'smem constant byte address 0x4 - core index']
  #allocation1 [shape = 'u32[144,128]{1,0:T(1,128)}', space=vmem, size = 0x12000, scoped, tag = 'internal scratch']
  #allocation2 [shape = 'f32[8,1]{1,0:T(8,128)}', space=vmem, size = 0x1000, scoped, tag = 'scratch operand']
  #allocation3 [shape = 'f32[8,1]{1,0:T(8,128)}', space=vmem, size = 0x1000, scoped, tag = 'scratch operand']
  %s0 = inlined_call_operand.vmem [shape: f32[8,32], index: 0, kind: input, shape index: {}]
  %s1 = inlined_call_operand.hbm [shape: f32[8,32], index: 1, kind: input, shape index: {}]
  %s2 = inlined_call_operand.vmem [shape: s32[8,1], index: 2, kind: input, shape index: {}]
  %s3 = inlined_call_operand.hbm [shape: f32[1,2], index: 3, kind: output, shape index: {}]
  %s4 = sld [smem:[#allocation0]]
  $region34: #{tpu_custom_call.1} parent=0
    _
  %s6 = ssub.s32 1, %s4
  %s7 = scalar_select 0, %s6, %s4
  $region1: #{tpu_custom_call.1} parent=0
    #allocation4 [shape = 'u8[4096]{0}', space=vmem, size = 0x1000, scoped, tag = 'input window, operand 1, single buffered']
    #allocation5 [shape = 's32[1]{0}', space=sflag, size = 0x4, scoped, tag = 'scoped memory for tpu_custom_call.1']
    #allocation6 [shape = 's32[1]{0}', space=sflag, size = 0x4, scoped, tag = 'scoped memory for tpu_custom_call.1']
    #allocation7 [shape = 'u8[512]{0}', space=smem, size = 0x200, scoped, tag = 'output window, operand 0, single buffered']
    %8 = vsyncpa [#allocation5], 0
    %9 = vsyncpa [#allocation6], 0
    // Predicated region
    $region2: #{tpu_custom_call.1} parent=1 // pred_check
      _
    $region3: #{tpu_custom_call.1} parent=1 // pred_check_branch
      %11 = sbr.rel (0) target = $region5
    $region4: #{tpu_custom_call.1} parent=1 // pred_region
      %s12 = sadd.s32 0, 0
      %p13 = scmp.lt.s32.totalorder %s12, 0
      %s14 = scalar_select %p13, %s12, 0
      %p15 = scmp.lt.s32.totalorder %s14, 0
      %s16 = scalar_select %p15, %s14, 0
      %s17 = smul.addr %s16, 8
      %s18 = scalar_lea.vmem %s0, %s17
      %s19 = sadd.s32 0, 0
      %p20 = scmp.lt.s32.totalorder %s19, 0
      %s21 = scalar_select %p20, %s19, 0
    $region5: #{tpu_custom_call.1} parent=1 // pred_fallthru
      _
    // Predicated region
    $region6: #{tpu_custom_call.1} parent=1 // pred_check
      _
    $region7: #{tpu_custom_call.1} parent=1 // pred_check_branch
      %23 = sbr.rel (0) target = $region9
    $region8: #{tpu_custom_call.1} parent=1 // pred_region
      %s24 = sadd.s32 0, 0
      %p25 = scmp.lt.s32.totalorder %s24, 0
      %s26 = scalar_select %p25, %s24, 0
      %s28 = ssub.s32 128, 128
      %29 = vsyncadd [#allocation5], %s28
      %s30 = smul.addr %s26, 128
      %s31 = scalar_lea.hbm %s1, %s30
      %s33 = sshll.u32 [#allocation4], 4
      %s34 = int_to_ptr.vmem [resolvable:$true] %s33
      %36 = dma.hbm_to_vmem [thread:$0]  %s31, 128, %s34, [#allocation5]
    $region9: #{tpu_custom_call.1} parent=1 // pred_fallthru
      _
    // Predicated region
    $region10: #{tpu_custom_call.1} parent=1 // pred_check
      _
    $region11: #{tpu_custom_call.1} parent=1 // pred_check_branch
      %38 = sbr.rel (0) target = $region13
    $region12: #{tpu_custom_call.1} parent=1 // pred_region
      %s39 = sadd.s32 0, 0
      %p40 = scmp.lt.s32.totalorder %s39, 0
      %s41 = scalar_select %p40, %s39, 0
      %p42 = scmp.lt.s32.totalorder %s41, 0
      %s43 = scalar_select %p42, %s41, 0
      %s44 = smul.addr %s43, 8
      %s45 = scalar_lea.vmem %s2, %s44
      %s46 = sadd.s32 0, 0
      %p47 = scmp.lt.s32.totalorder %s46, 0
      %s48 = scalar_select %p47, %s46, 0
    $region13: #{tpu_custom_call.1} parent=1 // pred_fallthru
      _
    // Predicated region
    $region14: #{tpu_custom_call.1} parent=1 // pred_check
      _
    $region15: #{tpu_custom_call.1} parent=1 // pred_check_branch
      %50 = sbr.rel (0) target = $region17
    $region16: #{tpu_custom_call.1} parent=1 // pred_region
      %51 = dma.done [#allocation5], 128
    $region17: #{tpu_custom_call.1} parent=1 // pred_fallthru
      _
    %s52 = sadd.s32 0, 0
    %p53 = scmp.lt.s32.totalorder %s52, 0
    %s54 = scalar_select %p53, %s52, 0
    %p55 = scmp.lt.s32.totalorder %s54, 0
    %s56 = scalar_select %p55, %s54, 0
    %s57 = smul.addr %s56, 8
    %s58 = scalar_lea.vmem %s0, %s57
    %s59 = sadd.s32 0, 0
    %p60 = scmp.lt.s32.totalorder %s59, 0
    %s61 = scalar_select %p60, %s59, 0
    %p62 = scmp.lt.s32.totalorder %s61, 0
    %s63 = scalar_select %p62, %s61, 0
    %s64 = smul.addr %s63, 8
    %s65 = scalar_lea.vmem %s2, %s64
    %s66 = sadd.s32 0, 0
    %p67 = scmp.lt.s32.totalorder %s66, 0
    %s68 = scalar_select %p67, %s66, 0
    %p69 = scmp.lt.s32.totalorder %s68, 0
    %s70 = scalar_select %p69, %s68, 0
    %s71 = smul.addr %s70, 8
    %s72 = scalar_lea.vmem %s0, %s71
    %s73 = sadd.s32 0, 0
    %p74 = scmp.lt.s32.totalorder %s73, 0
    %s75 = scalar_select %p74, %s73, 0
    %s76 = sadd.s32 0, 0
    %p77 = scmp.lt.s32.totalorder %s76, 0
    %s78 = scalar_select %p77, %s76, 0
    %s79 = sadd.s32 0, 0
    %p80 = scmp.lt.s32.totalorder %s79, 0
    %s81 = scalar_select %p80, %s79, 0
    %p82 = scmp.lt.s32.totalorder %s81, 0
    %s83 = scalar_select %p82, %s81, 0
    %s84 = smul.addr %s83, 8
    %s85 = scalar_lea.vmem %s2, %s84
    %s86 = sadd.s32 0, 0
    %p87 = scmp.lt.s32.totalorder %s86, 0
    %s88 = scalar_select %p87, %s86, 0
    %p89 = scmp.eq.s32.totalorder 0, 0
    // Predicated region
    $region18: #{tpu_custom_call.1} parent=1 // pred_check
      %p90 = pneg %p89
    $region19: #{tpu_custom_call.1} parent=1 // pred_check_branch
      %92 = sbr.rel (%p90) target = $region21
    $region20: #{tpu_custom_call.1} parent=1 // pred_region
      %vm93 = vcmask 7168
      %94 = vst.msk [vmem:[#allocation2] sm:$0xff] %vm93, 0.0
      %95 = vst.msk [vmem:[#allocation3] sm:$0xff] %vm93, 0.0
    $region21: #{tpu_custom_call.1} parent=1 // pred_fallthru
      _
    %v96 = vld [vmem:[%s72] sm:$0xff]
    %v97 = vld [vmem:[#allocation4] sm:$0xff]
    %v98 = vld [vmem:[%s85] sm:$0xff]
    %vm99 = vcmask 261120
    %v100 = vsel %vm99, %v96, -inf
    %101 = vmax.xlane.f32.xlu0 %v100
    %v102 = vpop.xlane.xlu0 %101
    %v103 = vsel %vm99, %v97, -inf
    %104 = vmax.xlane.f32.xlu0 %v103
    %v105 = vpop.xlane.xlu0 %104
    %v106 = vsub.f32 %v96, %v102
    %v107 = vmul.f32 %v106, 0.25
    %v108 = vsub.f32 %v97, %v105
    %v109 = vmul.f32 %v108, 0.25
    %v110 = vmul.f32 %v107, 1.442695
    %v111 = vpow.pop %v110
    %v112 = vsel %vm99, %v111, 0.0
    %113 = vadd.xlane.f32.xlu0 %v112
    %v114 = vpop.xlane.xlu0 %113
    %v115 = vlog2.pop %v114
    %v116 = vmul.f32 %v115, 0.6931472
    %v117 = vmul.f32 %v109, 1.442695
    %v118 = vpow.pop %v117
    %v119 = vsel %vm99, %v118, 0.0
    %120 = vadd.xlane.f32.xlu0 %v119
    %v121 = vpop.xlane.xlu0 %120
    %v122 = vsub.f32 %v109, %v107
    %v123 = vmul.f32 %v118, %v122
    %v124 = vsel %vm99, %v123, 0.0
    %125 = vadd.xlane.f32.xlu0 %v124
    %v126 = vpop.xlane.xlu0 %125
    %v127 = vrcp.pop %v121
    %v128 = vmul.f32 %v126, %v127
    %v129 = vlog2.pop %v121
    %v130 = vmul.f32 %v129, 0.6931472
    %v131 = vsub.f32 %v116, %v130
    %v132 = vadd.f32 %v128, %v131
    %v133 = vmul.f32 %v106, 1.442695
    %v134 = vpow.pop %v133
    %v135 = vsel %vm99, %v134, 0.0
    %136 = vadd.xlane.f32.xlu0 %v135
    %v137 = vpop.xlane.xlu0 %136
    %v138 = vlog2.pop %v137
    %v139 = vmul.f32 %v138, 0.6931472
    %v140 = vlaneseq
    %v141 = vand.u32 %v140, 127
    %142 = vset.pattern.permute.xlu0 0
    %143 = vperm.xlu0 %142, %v98
    %v144 = vpop.permute.xlu0 %143
    %vm145 = vcmp.eq.s32.totalorder %v141, %v144
    %v146 = vsel %vm145, %v96, 0.0
    %v147 = vsel %vm99, %v146, 0.0
    %148 = vadd.xlane.f32.xlu0 %v147
    %v149 = vpop.xlane.xlu0 %148
    %v150 = vadd.f32 %v102, %v139
    %v151 = vsub.f32 %v150, %v149
    %s152 = sadd.s32 0, 0
    %v153 = vlaneseq
    %v154 = vshrl.u32 %v153, 7
    %s155 = smul.u32 %s152, 8
    %v156 = vstv %s155
    %v157 = vadd.s32 %v154, %v156
    %vm158 = vcmp.lt.s32.totalorder %v157, 8
    %v159 = vld [vmem:[#allocation2] sm:$0xff]
    %v160 = vsel %vm158, %v132, 0.0
    %v161 = vadd.f32 %v159, %v160
    %vm162 = vcmask 7168
    %163 = vst.msk [vmem:[#allocation2] sm:$0xff] %vm162, %v161
    %v164 = vld [vmem:[#allocation3] sm:$0xff]
    %v165 = vsel %vm158, %v151, 0.0
    %v166 = vadd.f32 %v164, %v165
    %167 = vst.msk [vmem:[#allocation3] sm:$0xff] %vm162, %v166
    // Predicated region
    $region22: #{tpu_custom_call.1} parent=1 // pred_check
      %p168 = pneg %p89
    $region23: #{tpu_custom_call.1} parent=1 // pred_check_branch
      %170 = sbr.rel (%p168) target = $region25
    $region24: #{tpu_custom_call.1} parent=1 // pred_region
      %v171 = vld [vmem:[#allocation2] sm:$0xff]
      %v172 = vsel %vm162, %v171, 0.0
      %173 = vadd.xlane.f32.xlu0 %v172
      %v174 = vpop.xlane.xlu0 %173
      %v175 = vrot.slane %v174, 4
      %v176 = vadd.f32 %v174, %v175
      %v177 = vrot.slane %v176, 2
      %v178 = vadd.f32 %v176, %v177
      %v179 = vrot.slane %v178, 1
      %v180 = vadd.f32 %v178, %v179
      %s181 = vtos %v180
      %s182 = smul.f32 %s181, 0.125
      %s183 = smul.f32 %s182, 11.2
      %s184 = scalar_lea.smem [#allocation7], 0
      %185 = sst [smem:[%s184]] %s183
      %v186 = vld [vmem:[#allocation3] sm:$0xff]
      %v187 = vsel %vm162, %v186, 0.0
      %188 = vadd.xlane.f32.xlu0 %v187
      %v189 = vpop.xlane.xlu0 %188
      %v190 = vrot.slane %v189, 4
      %v191 = vadd.f32 %v189, %v190
      %v192 = vrot.slane %v191, 2
      %v193 = vadd.f32 %v191, %v192
      %v194 = vrot.slane %v193, 1
      %v195 = vadd.f32 %v193, %v194
      %s196 = vtos %v195
      %s197 = smul.f32 %s196, 0.125
      %s198 = smul.f32 %s197, 0.3
      %s199 = scalar_lea.smem [#allocation7], 1
      %200 = sst [smem:[%s199]] %s198
    $region25: #{tpu_custom_call.1} parent=1 // pred_fallthru
      _
    // Predicated region
    $region26: #{tpu_custom_call.1} parent=1 // pred_check
      _
    $region27: #{tpu_custom_call.1} parent=1 // pred_check_branch
      %202 = sbr.rel (0) target = $region29
    $region28: #{tpu_custom_call.1} parent=1 // pred_region
      %s204 = ssub.s32 16, 16
      %205 = vsyncadd [#allocation6], %s204
      %208 = dma.smem_to_hbm [#allocation7], 16, %s3, [#allocation6]
    $region29: #{tpu_custom_call.1} parent=1 // pred_fallthru
      _
    // Predicated region
    $region30: #{tpu_custom_call.1} parent=1 // pred_check
      _
    $region31: #{tpu_custom_call.1} parent=1 // pred_check_branch
      %210 = sbr.rel (0) target = $region33
    $region32: #{tpu_custom_call.1} parent=1 // pred_region
      %211 = dma.done [#allocation6], 16
    $region33: #{tpu_custom_call.1} parent=1 // pred_fallthru
      _
    %212 = sfence
    %213 = vsyncpa [#allocation5], 1
    %214 = vsyncpa [#allocation6], 1

</llo_original>
